<compile_context>
chip_gen: v5e
topology: v5e:2x2
jax: 0.10.0
libtpu: 0.0.40
codegen_flags: <defaults>
</compile_context>

<pallas_src>
import jax
import jax.numpy as jnp
from jax.experimental import pallas as pl
from jax.experimental.pallas import tpu as pltpu


def _softplus(x):
    # numerically stable softplus: max(x, 0) + log1p(exp(-|x|))
    return jnp.maximum(x, 0.0) + jnp.log1p(jnp.exp(-jnp.abs(x)))


def _gameta_kernel(x_ref, ph_ref, phead_ref, out_ref):
    batch = x_ref.shape[0]
    d_in = x_ref.shape[1]
    hidden = ph_ref.shape[1]
    out_size = out_ref.shape[1] // 2

    x = x_ref[...]                                    # (B, D_in)

    # ---- hidden layer on the MXU: h = relu(x @ W_hid + b_hid) ----
    ph = ph_ref[...]                                  # (D_in + 1, H)
    w_hid = ph[:d_in, :]                              # (D_in, H) natural (K, N)
    b_hid = ph[d_in:, :]                              # (1, H)
    h = jnp.dot(x, w_hid, preferred_element_type=jnp.float32) + b_hid
    h = jnp.maximum(h, 0.0)                           # ReLU, (B, H)

    # ---- fused mu / log_std head: one MXU matmul against (H, 2*out) ----
    phead = phead_ref[...]                            # (H + 1, 2*out)
    w_head = phead[:hidden, :]                        # (H, 2*out) natural (K, N)
    b_head = phead[hidden:, :]                        # (1, 2*out)
    head = jnp.dot(h, w_head, preferred_element_type=jnp.float32) + b_head
    # head: (B, 2*out) = [mu | log_std]

    # sigma = (softplus(log_std) + 1e-6) * (0.1 + 0.2 * sigmoid(mean(|mu|)))
    # Softplus over the whole fused tile (mu half discarded by the select;
    # extra EUP work on out_size lanes is free), everything stays lane-dense.
    sp = _softplus(head) + 1e-6

    col = jax.lax.broadcasted_iota(jnp.int32, head.shape, 1)
    is_mu = col < out_size                            # columns [:out] are mu

    mu_abs_sum = jnp.sum(jnp.where(is_mu, jnp.abs(head), 0.0))
    mean_abs_mu = mu_abs_sum / float(batch * out_size)   # global over whole batch
    scale = 0.1 + 0.2 * jax.nn.sigmoid(mean_abs_mu)

    out_ref[...] = jnp.where(is_mu, head, sp * scale).astype(out_ref.dtype)


def pack_params(p):
    """Pack raw (PyTorch-layout) params into two lane-dense kernel slabs."""
    # p_hid: rows [:d_in] = W_hid^T (d_in, H), last row = b_hid
    p_hid = jnp.concatenate([p["w_hid"].T, p["b_hid"][None, :]], axis=0)
    # p_head: rows [:H] = [W_mu^T | W_std^T] (H, 2*out), last row = [b_mu | b_std]
    w_head_t = jnp.concatenate([p["w_mu"].T, p["w_std"].T], axis=1)
    b_head = jnp.concatenate([p["b_mu"], p["b_std"]])[None, :]
    p_head = jnp.concatenate([w_head_t, b_head], axis=0)
    return p_hid.astype(jnp.float32), p_head.astype(jnp.float32)


def gameta_forward(x, p_hid, p_head, return_params=False):
    """Pallas implementation of GAMeta.forward.

    x:      (batch, input_size) float32
    p_hid:  (input_size + 1, hidden) float32   packed hidden layer
    p_head: (hidden + 1, 2*output_size) float32 packed mu/std heads
    """
    batch, d_in = x.shape
    hidden = p_hid.shape[1]
    out_size = p_head.shape[1] // 2

    flops = int(2 * batch * d_in * hidden + 2 * batch * hidden * 2 * out_size)
    bytes_accessed = sum(int(a.size) * a.dtype.itemsize for a in (x, p_hid, p_head))
    bytes_accessed += batch * 2 * out_size * 4        # output
    cost = pl.CostEstimate(
        flops=flops,
        transcendentals=int(3 * batch * 2 * out_size + 1),
        bytes_accessed=int(bytes_accessed),
    )

    vmem = pl.BlockSpec(memory_space=pltpu.MemorySpace.VMEM)
    fused = pl.pallas_call(
        _gameta_kernel,
        out_shape=jax.ShapeDtypeStruct((batch, 2 * out_size), jnp.float32),
        in_specs=[vmem, vmem, vmem],
        out_specs=vmem,
        cost_estimate=cost,
    )(x, p_hid, p_head)

    mu = fused[:, :out_size]
    sigma = fused[:, out_size:]
    if return_params:
        return mu, sigma
    return mu


def init_params(key, input_size, hidden_size, output_size):
    """Raw params in PyTorch nn.Linear layout (weight: (out_features, in_features))."""
    k1, k2, k3, k4, k5, k6 = jax.random.split(key, 6)
    bound_h = 1.0 / (input_size ** 0.5)
    bound_o = 1.0 / (hidden_size ** 0.5)
    return {
        "w_hid": jax.random.uniform(k1, (hidden_size, input_size), jnp.float32,
                                    -bound_h, bound_h),
        "b_hid": jax.random.uniform(k2, (hidden_size,), jnp.float32,
                                    -bound_h, bound_h),
        "w_mu": jax.random.uniform(k3, (output_size, hidden_size), jnp.float32,
                                   -bound_o, bound_o),
        "b_mu": jax.random.uniform(k4, (output_size,), jnp.float32,
                                   -bound_o, bound_o),
        "w_std": jax.random.uniform(k5, (output_size, hidden_size), jnp.float32,
                                    -bound_o, bound_o),
        "b_std": jax.random.uniform(k6, (output_size,), jnp.float32,
                                    -bound_o, bound_o),
    }


def _reference_forward(x, p):
    h = jnp.maximum(x @ p["w_hid"].T + p["b_hid"], 0.0)
    mu = h @ p["w_mu"].T + p["b_mu"]
    log_std = h @ p["w_std"].T + p["b_std"]
    sigma = jax.nn.softplus(log_std) + 1e-6
    sigma = sigma * (0.1 + 0.2 * jax.nn.sigmoid(jnp.mean(jnp.abs(mu))))
    return mu, sigma


if __name__ == "__main__":
    # Small shapes consistent with the module (input_size=4, output_size=1).
    batch, input_size, hidden_size, output_size = 8, 4, 128, 1

    key = jax.random.PRNGKey(0)
    kx, kp = jax.random.split(key)
    x = jax.random.normal(kx, (batch, input_size), jnp.float32)
    params = init_params(kp, input_size, hidden_size, output_size)
    p_hid, p_head = pack_params(params)   # pack once at init time

    mu, sigma = gameta_forward(x, p_hid, p_head, return_params=True)
    jax.block_until_ready((mu, sigma))

    mu_ref, sigma_ref = _reference_forward(x, params)
    assert jnp.allclose(mu, mu_ref, atol=1e-5, rtol=1e-5)
    assert jnp.allclose(sigma, sigma_ref, atol=1e-5, rtol=1e-5)

    # default forward path (returns mu only)
    mu_only = gameta_forward(x, p_hid, p_head)
    jax.block_until_ready(mu_only)
    assert jnp.allclose(mu_only, mu_ref, atol=1e-5, rtol=1e-5)

    print("KERNEL_OK")
</pallas_src>

<mosaic_0001>
module attributes {stable_mosaic.version = 11 : i64} {
  func.func @_gameta_kernel(%arg0: memref<8x4xf32, #tpu.memory_space<vmem>>, %arg1: memref<5x128xf32, #tpu.memory_space<vmem>>, %arg2: memref<129x2xf32, #tpu.memory_space<vmem>>, %arg3: memref<8x2xf32, #tpu.memory_space<vmem>>) attributes {dimension_semantics = [], scalar_prefetch = 0 : i64, scratch_operands = 0 : i64, tpu.core_type = #tpu.core_type<tc>} {
    %c0 = arith.constant 0 : index
    %c0_0 = arith.constant 0 : index
    %0 = vector.load %arg0[%c0, %c0_0] : memref<8x4xf32, #tpu.memory_space<vmem>>, vector<8x4xf32>
    %c0_1 = arith.constant 0 : index
    %c0_2 = arith.constant 0 : index
    %1 = vector.load %arg1[%c0_1, %c0_2] : memref<5x128xf32, #tpu.memory_space<vmem>>, vector<5x128xf32>
    %2 = vector.extract_strided_slice %1 {offsets = [0, 0], sizes = [4, 128], strides = [1, 1]} : vector<5x128xf32> to vector<4x128xf32>
    %3 = vector.extract_strided_slice %1 {offsets = [4, 0], sizes = [1, 128], strides = [1, 1]} : vector<5x128xf32> to vector<1x128xf32>
    %cst = arith.constant dense<0.000000e+00> : vector<8x128xf32>
    %4 = tpu.matmul %0, %2, %cst {dimension_numbers = #tpu.dot_dimension_numbers<[1], [0], [0], [1], [0, 0, 1, 1], [], []>} : vector<8x4xf32>, vector<4x128xf32>, vector<8x128xf32> -> vector<8x128xf32>
    %5 = vector.broadcast %3 : vector<1x128xf32> to vector<8x128xf32>
    %6 = arith.addf %4, %5 : vector<8x128xf32>
    %cst_3 = arith.constant 0.000000e+00 : f32
    %7 = vector.broadcast %cst_3 : f32 to vector<8x128xf32>
    %8 = arith.maximumf %6, %7 : vector<8x128xf32>
    %c0_4 = arith.constant 0 : index
    %c0_5 = arith.constant 0 : index
    %9 = vector.load %arg2[%c0_4, %c0_5] : memref<129x2xf32, #tpu.memory_space<vmem>>, vector<129x2xf32>
    %10 = vector.extract_strided_slice %9 {offsets = [0, 0], sizes = [128, 2], strides = [1, 1]} : vector<129x2xf32> to vector<128x2xf32>
    %11 = vector.extract_strided_slice %9 {offsets = [128, 0], sizes = [1, 2], strides = [1, 1]} : vector<129x2xf32> to vector<1x2xf32>
    %cst_6 = arith.constant dense<0.000000e+00> : vector<8x2xf32>
    %12 = tpu.matmul %8, %10, %cst_6 {dimension_numbers = #tpu.dot_dimension_numbers<[1], [0], [0], [1], [0, 0, 1, 1], [], []>} : vector<8x128xf32>, vector<128x2xf32>, vector<8x2xf32> -> vector<8x2xf32>
    %13 = vector.broadcast %11 : vector<1x2xf32> to vector<8x2xf32>
    %14 = arith.addf %12, %13 : vector<8x2xf32>
    %cst_7 = arith.constant 0.000000e+00 : f32
    %15 = vector.broadcast %cst_7 : f32 to vector<8x2xf32>
    %16 = arith.maximumf %14, %15 : vector<8x2xf32>
    %17 = math.absf %14 : vector<8x2xf32>
    %cst_8 = arith.constant 0.000000e+00 : f32
    %18 = vector.broadcast %cst_8 : f32 to vector<8x2xf32>
    %19 = arith.subf %18, %17 : vector<8x2xf32>
    %20 = math.exp %19 : vector<8x2xf32>
    %21 = math.log1p %20 : vector<8x2xf32>
    %22 = arith.addf %16, %21 : vector<8x2xf32>
    %cst_9 = arith.constant 9.99999997E-7 : f32
    %23 = vector.broadcast %cst_9 : f32 to vector<8x2xf32>
    %24 = arith.addf %22, %23 : vector<8x2xf32>
    %25 = tpu.iota {dimensions = array<i32: 1>} : vector<8x2xi32>
    %c1_i32 = arith.constant 1 : i32
    %26 = vector.broadcast %c1_i32 : i32 to vector<8x2xi32>
    %27 = arith.cmpi slt, %25, %26 : vector<8x2xi32>
    %28 = math.absf %14 : vector<8x2xf32>
    %cst_10 = arith.constant 0.000000e+00 : f32
    %29 = vector.broadcast %cst_10 : f32 to vector<8x2xf32>
    %30 = arith.select %27, %28, %29 : vector<8x2xi1>, vector<8x2xf32>
    %31 = vector.shape_cast %30 : vector<8x2xf32> to vector<1x8x2xf32>
    %cst_11 = arith.constant dense<0.000000e+00> : vector<1xf32>
    %32 = vector.multi_reduction <add>, %31, %cst_11 [1, 2] : vector<1x8x2xf32> to vector<1xf32>
    %33 = vector.shape_cast %32 : vector<1xf32> to vector<1x1x1xf32>
    %34 = vector.extract %33[0, 0, 0] : f32 from vector<1x1x1xf32>
    %cst_12 = arith.constant 8.000000e+00 : f32
    %35 = arith.divf %34, %cst_12 : f32
    %36 = arith.negf %35 : f32
    %37 = math.exp %36 : f32
    %cst_13 = arith.constant 1.000000e+00 : f32
    %38 = arith.addf %cst_13, %37 : f32
    %39 = arith.divf %cst_13, %38 : f32
    %cst_14 = arith.constant 2.000000e-01 : f32
    %40 = arith.mulf %cst_14, %39 : f32
    %cst_15 = arith.constant 1.000000e-01 : f32
    %41 = arith.addf %cst_15, %40 : f32
    %42 = vector.broadcast %41 : f32 to vector<8x2xf32>
    %43 = arith.mulf %24, %42 : vector<8x2xf32>
    %44 = arith.select %27, %14, %43 : vector<8x2xi1>, vector<8x2xf32>
    %c0_16 = arith.constant 0 : index
    %c0_17 = arith.constant 0 : index
    %45 = vector.load %arg3[%c0_16, %c0_17] : memref<8x2xf32, #tpu.memory_space<vmem>>, vector<8x2xf32>
    tpu.vector_store %arg3[%c0_16, %c0_17], %44 {strides = array<i32>} : memref<8x2xf32, #tpu.memory_space<vmem>>, vector<8x2xf32>,
    return
  }
}

</mosaic_0001>

<llo_original>
// kernel: tpu_custom_call.1
$region0: #{tpu_custom_call.1}
  #allocation0 [shape = 'u32[]', space=smem, size = 0x4, offset = 0x4, fixed_abs, tag = 'smem constant byte address 0x4 - core index']
  #allocation1 [shape = 'u32[72,128]{1,0:T(1,128)}', space=vmem, size = 0x9000, scoped, tag = 'internal scratch']
  %s0 = inlined_call_operand.vmem [shape: f32[8,4], index: 0, kind: input, shape index: {}]
  %s1 = inlined_call_operand.vmem [shape: f32[5,128], index: 1, kind: input, shape index: {}]
  %s2 = inlined_call_operand.vmem [shape: f32[129,2], index: 2, kind: input, shape index: {}]
  %s3 = inlined_call_operand.vmem [shape: f32[8,2], index: 3, kind: output, shape index: {}]
  %s4 = sld [smem:[#allocation0]]
  $region22: #{tpu_custom_call.1} parent=0
    _
  %s6 = ssub.s32 1, %s4
  %s7 = scalar_select 0, %s6, %s4
  // Predicated region
  $region2: #{tpu_custom_call.1} parent=0 // pred_check
    _
  $region3: #{tpu_custom_call.1} parent=0 // pred_check_branch
    %9 = sbr.rel (0) target = $region5
  $region4: #{tpu_custom_call.1} parent=0 // pred_region
    _
  $region5: #{tpu_custom_call.1} parent=0 // pred_fallthru
    _
  // Predicated region
  $region6: #{tpu_custom_call.1} parent=0 // pred_check
    _
  $region7: #{tpu_custom_call.1} parent=0 // pred_check_branch
    %11 = sbr.rel (0) target = $region9
  $region8: #{tpu_custom_call.1} parent=0 // pred_region
    _
  $region9: #{tpu_custom_call.1} parent=0 // pred_fallthru
    _
  // Predicated region
  $region10: #{tpu_custom_call.1} parent=0 // pred_check
    _
  $region11: #{tpu_custom_call.1} parent=0 // pred_check_branch
    %13 = sbr.rel (0) target = $region13
  $region12: #{tpu_custom_call.1} parent=0 // pred_region
    _
  $region13: #{tpu_custom_call.1} parent=0 // pred_fallthru
    _
  %v14 = vld [vmem:[%s0] sm:$0xff]
  %v15 = vld [vmem:[%s1] sm:$0x1f]
  %v16 = vperm.slane %v15, 4
  %vm17 = vcmask 31744
  %v19 = vsel %vm17, %v14, 0
  %vm21 = vcmask 1043456
  %v23 = vsel %vm21, %v15, 0
  %25 = vmatpush.msra.mxu0 0.0
  %26 = vmatpush.msra.mxu0 0.0
  %27 = vmatpush.msra.mxu0 0.0
  %28 = vmatpush.msra.mxu0 0.0
  %29 = vmatpush.msra.mxu0 0.0
  %30 = vmatpush.msra.mxu0 0.0
  %31 = vmatpush.msra.mxu0 0.0
  %32 = vmatpush.msra.mxu0 0.0
  %33 = vmatpush.msra.mxu0 0.0
  %34 = vmatpush.msra.mxu0 0.0
  %35 = vmatpush.msra.mxu0 0.0
  %36 = vmatpush.msra.mxu0 0.0
  %37 = vmatpush.msra.mxu0 0.0
  %38 = vmatpush.msra.mxu0 0.0
  %39 = vmatpush.msra.mxu0 0.0
  %40 = vmatpush.msra.mxu0 %v23
  %41 = vmatmul.f32.gmra.mxu0 %v19
  %v42 = vpop.f32.mrf.mxu0
  %v43 = vadd.f32 %v16, %v42
  %44 = vdwg.mxu0
  %v45 = vmax.f32 %v43, 0.0
  %v46 = vld [vmem:[%s2] sm:$0xff]
  %v47 = vld [vmem:[%s2 + $0x8] sm:$0xff]
  %v48 = vld [vmem:[%s2 + $0x10] sm:$0xff]
  %v49 = vld [vmem:[%s2 + $0x18] sm:$0xff]
  %v50 = vld [vmem:[%s2 + $0x20] sm:$0xff]
  %v51 = vld [vmem:[%s2 + $0x28] sm:$0xff]
  %v52 = vld [vmem:[%s2 + $0x30] sm:$0xff]
  %v53 = vld [vmem:[%s2 + $0x38] sm:$0xff]
  %v54 = vld [vmem:[%s2 + $0x40] sm:$0xff]
  %v55 = vld [vmem:[%s2 + $0x48] sm:$0xff]
  %v56 = vld [vmem:[%s2 + $0x50] sm:$0xff]
  %v57 = vld [vmem:[%s2 + $0x58] sm:$0xff]
  %v58 = vld [vmem:[%s2 + $0x60] sm:$0xff]
  %v59 = vld [vmem:[%s2 + $0x68] sm:$0xff]
  %v60 = vld [vmem:[%s2 + $0x70] sm:$0xff]
  %v61 = vld [vmem:[%s2 + $0x78] sm:$0xff]
  %v62 = vld [vmem:[%s2 + $0x80] sm:$0x1]
  %v63 = vperm.slane %v62, 0
  %64 = vmatpush.msra.mxu0 %v61
  %65 = vmatpush.msra.mxu0 %v60
  %66 = vmatpush.msra.mxu0 %v59
  %67 = vmatpush.msra.mxu0 %v58
  %68 = vmatpush.msra.mxu0 %v57
  %69 = vmatpush.msra.mxu0 %v56
  %70 = vmatpush.msra.mxu0 %v55
  %71 = vmatpush.msra.mxu0 %v54
  %72 = vmatpush.msra.mxu0 %v53
  %73 = vmatpush.msra.mxu0 %v52
  %74 = vmatpush.msra.mxu0 %v51
  %75 = vmatpush.msra.mxu0 %v50
  %76 = vmatpush.msra.mxu0 %v49
  %77 = vmatpush.msra.mxu0 %v48
  %78 = vmatpush.msra.mxu0 %v47
  %79 = vmatpush.msra.mxu0 %v46
  %80 = vmatmul.f32.gmra.mxu0 %v45
  %v81 = vpop.f32.mrf.mxu0
  %v82 = vadd.f32 %v63, %v81
  %83 = vdwg.mxu0
  %v84 = vmax.f32 %v82, 0.0
  %v85 = vand.u32 2147483647, %v82
  %v86 = vsub.f32 0.0, %v85
  %v87 = vmul.f32 %v86, 1.442695
  %v88 = vpow.pop %v87
  %v89 = vadd.f32 %v88, 1.0
  %v90 = vlog2.pop %v89
  %v91 = vmul.f32 %v90, 0.6931472
  %v92 = vmul.f32 -0.5, %v88
  %v93 = vadd.f32 %v92, 1.0
  %v94 = vmul.f32 %v93, %v88
  %v95 = vand.u32 2147483647, %v88
  %vm96 = vcmp.lt.f32.partialorder %v95, 0.0004427343
  %v97 = vsel %vm96, %v94, %v91
  %v98 = vadd.f32 %v84, %v97
  %v99 = vadd.f32 %v98, 1e-06
  %v100 = vlaneseq
  %v101 = vand.u32 %v100, 127
  %vm102 = vcmp.lt.s32.totalorder %v101, 1
  %v103 = vsel %vm102, %v85, 0.0
  %vm104 = vcmask 15360
  %v105 = vsel %vm104, %v103, 0.0
  %106 = vadd.xlane.f32.xlu0 %v105
  %v107 = vpop.xlane.xlu0 %106
  %v108 = vrot.slane %v107, 4
  %v109 = vadd.f32 %v107, %v108
  %v110 = vrot.slane %v109, 2
  %v111 = vadd.f32 %v109, %v110
  %v112 = vrot.slane %v111, 1
  %v113 = vadd.f32 %v111, %v112
  %s114 = vtos %v113
  %v115 = vrcp.pop 8.0
  %v116 = vmul.f32 8.0, %v115
  %v117 = vsub.f32 1.0, %v116
  %v118 = vmul.f32 %v115, %v117
  %v119 = vadd.f32 %v115, %v118
  %vm120 = vweird.f32 %v115
  %v121 = vsel %vm120, %v115, %v119
  %s122 = vtos %v121
  %s123 = smul.f32 %s114, %s122
  %s124 = sxor.u32 %s123, 2147483648
  %v125 = vstv %s124
  %v126 = vmul.f32 %v125, 1.442695
  %v127 = vpow.pop %v126
  %s128 = vtos %v127
  %s129 = sadd.f32 %s128, 1.0
  %v130 = vstv %s129
  %v131 = vrcp.pop %v130
  %v132 = vmul.f32 %v130, %v131
  %v133 = vsub.f32 1.0, %v132
  %v134 = vmul.f32 %v131, %v133
  %v135 = vadd.f32 %v131, %v134
  %vm136 = vweird.f32 %v130
  %vm137 = vweird.f32 %v131
  %vm138 = vmor %vm136, %vm137
  %v139 = vsel %vm138, %v131, %v135
  %v140 = vand.u32 2147483647, %v130
  %vm141 = vcmp.eq.f32.partialorder %v140, 8.507059e+37
  %v142 = vand.u32 %v130, 2147483648
  %v143 = vor.u32 1.1754944e-38, %v142
  %v144 = vsel %vm141, %v143, %v139
  %s145 = vtos %v144
  %s146 = smul.f32 %s145, 0.2
  %s147 = sadd.f32 %s146, 0.1
  %v148 = vstv %s147
  %v149 = vmul.f32 %v99, %v148
  %v150 = vsel %vm102, %v82, %v149
  %151 = vst.msk [vmem:[%s3] sm:$0xff] %vm104, %v150
  // Predicated region
  $region14: #{tpu_custom_call.1} parent=0 // pred_check
    _
  $region15: #{tpu_custom_call.1} parent=0 // pred_check_branch
    %153 = sbr.rel (0) target = $region17
  $region16: #{tpu_custom_call.1} parent=0 // pred_region
    _
  $region17: #{tpu_custom_call.1} parent=0 // pred_fallthru
    _
  // Predicated region
  $region18: #{tpu_custom_call.1} parent=0 // pred_check
    _
  $region19: #{tpu_custom_call.1} parent=0 // pred_check_branch
    %155 = sbr.rel (0) target = $region21
  $region20: #{tpu_custom_call.1} parent=0 // pred_region
    _
  $region21: #{tpu_custom_call.1} parent=0 // pred_fallthru
    _

</llo_original>
